<compile_context>
chip_gen: v5e
topology: v5e:2x2
jax: 0.10.0
libtpu: 0.0.40
codegen_flags: <defaults>
</compile_context>

<pallas_src>
import math

import jax
import jax.numpy as jnp
from jax import lax
from jax.experimental import pallas as pl
from jax.experimental.pallas import tpu as pltpu

_VMEM_BUDGET_BYTES = 40 * 1024 * 1024   # conservative: fits v7x's 64 MiB VMEM
_VMEM_LIMIT_CAP = 48 * 1024 * 1024


def _round_up(v: int, m: int) -> int:
    return ((v + m - 1) // m) * m


def _sublane_align(*dtypes) -> int:
    """Sublane (second-last dim) alignment: 8 for 32-bit, 16 for 16-bit."""
    return max([8] + [32 // jnp.dtype(d).itemsize for d in dtypes])


def _balanced_tile(dim: int, requested: int, align: int, min_tiles: int = 1):
    """Pick (tile, padded_dim, num_tiles) with tile % align == 0, near-equal
    tiles (padding waste < num_tiles*align instead of up to a full tile), and
    at least `min_tiles` tiles when the aligned dim allows it (megacore)."""
    dim_al = _round_up(dim, align)
    req = max(align, _round_up(min(requested, dim_al), align))
    n = pl.cdiv(dim_al, req)
    n = max(n, min(min_tiles, dim_al // align))
    tile = _round_up(pl.cdiv(dim_al, n), align)
    return tile, n * tile, n


def _make_matmul_kernel(*, has_bias: bool, b_resident: bool, tk: int, precision):
    """out[i,j] = sum_k a[i,k] @ b[k,j] (+ bias[j]), accumulated in f32 VMEM."""

    def kernel(a_ref, b_ref, *rest):
        if has_bias:
            bias_ref, o_ref, acc_ref = rest
        else:
            o_ref, acc_ref = rest

        k = pl.program_id(2)

        @pl.when(k == 0)
        def _():
            acc_ref[...] = jnp.zeros_like(acc_ref)

        if b_resident:
            # Whole (Kp, tn) panel of b is VMEM-resident; slice this k-step's
            # (tk, tn) chunk out of it.
            k_start = pl.multiple_of(k * tk, 128)
            b_blk = b_ref[pl.ds(k_start, tk), :]
        else:
            b_blk = b_ref[...]

        acc_ref[...] += jnp.dot(a_ref[...], b_blk,
                                preferred_element_type=jnp.float32,
                                precision=precision)

        @pl.when(k == pl.num_programs(2) - 1)
        def _():
            out = acc_ref[...]
            if has_bias:
                out = out + bias_ref[...]           # f32 epilogue
            o_ref[...] = out.astype(o_ref.dtype)

    return kernel


def pallas_matmul(a, b, bias=None, *, tm=512, tn=256, tk=1024,
                  compute_dtype=jnp.bfloat16, out_dtype=jnp.float32,
                  precision=None, b_resident=None, min_row_tiles=2):
    """Tiled Pallas matmul: a [M,K] @ b [K,N] (+ bias [N]) -> [M,N] in out_dtype.

    Inputs are cast to `compute_dtype` (default bf16) before any padding; the
    K dim is zero-padded so the reduction stays exact; accumulation is f32.
    """
    M, K = a.shape
    K2, N = b.shape
    assert K == K2, (a.shape, b.shape)

    cdt = jnp.dtype(compute_dtype if compute_dtype is not None else jnp.float32)
    odt = jnp.dtype(out_dtype)
    isize = cdt.itemsize

    m_align = _sublane_align(cdt, odt)
    tm, Mp, n_i = _balanced_tile(M, tm, m_align, min_tiles=min_row_tiles)
    tn, Np, n_j = _balanced_tile(N, tn, 128)
    tk, Kp, n_k = _balanced_tile(K, tk, 128)

    # Cast to the compute dtype *before* padding; skip pads on aligned dims.
    a_c = a if a.dtype == cdt else a.astype(cdt)
    b_c = b if b.dtype == cdt else b.astype(cdt)
    a_p = a_c if (Mp == M and Kp == K) else jnp.pad(a_c, ((0, Mp - M), (0, Kp - K)))
    b_p = b_c if (Kp == K and Np == N) else jnp.pad(b_c, ((0, Kp - K), (0, Np - N)))

    has_bias = bias is not None
    if has_bias:
        bias_row = jnp.zeros((1, Np), jnp.float32)
        bias_row = bias_row.at[0, :N].set(bias.reshape(-1).astype(jnp.float32))

    # VMEM plan (double-buffered inputs/outputs + f32 accumulator).
    a_buf = 2 * tm * tk * isize
    o_buf = 2 * tm * tn * odt.itemsize
    acc_buf = tm * tn * 4
    bias_buf = 2 * 8 * tn * 4 if has_bias else 0
    base = a_buf + o_buf + acc_buf + bias_buf
    b_stream_buf = 2 * tk * tn * isize
    b_resident_buf = 2 * Kp * tn * isize

    if b_resident is False or n_k <= 1:
        use_resident = False
    else:
        use_resident = (base + b_resident_buf) <= _VMEM_BUDGET_BYTES

    if use_resident:
        b_spec = pl.BlockSpec((Kp, tn), lambda i, j, k: (0, j))
        b_buf = b_resident_buf
    else:
        b_spec = pl.BlockSpec((tk, tn), lambda i, j, k: (k, j))
        b_buf = b_stream_buf

    vmem_limit = int(min(max(base + b_buf + (8 << 20), 32 << 20), _VMEM_LIMIT_CAP))

    in_specs = [pl.BlockSpec((tm, tk), lambda i, j, k: (i, k)), b_spec]
    operands = [a_p, b_p]
    if has_bias:
        in_specs.append(pl.BlockSpec((1, tn), lambda i, j, k: (0, j)))
        operands.append(bias_row)

    kernel = _make_matmul_kernel(has_bias=has_bias, b_resident=use_resident,
                                 tk=tk, precision=precision)

    out_p = pl.pallas_call(
        kernel,
        out_shape=jax.ShapeDtypeStruct((Mp, Np), odt),
        grid_spec=pltpu.PrefetchScalarGridSpec(
            num_scalar_prefetch=0,
            grid=(n_i, n_j, n_k),
            in_specs=in_specs,
            out_specs=pl.BlockSpec((tm, tn), lambda i, j, k: (i, j)),
            scratch_shapes=[pltpu.VMEM((tm, tn), jnp.float32)],
        ),
        compiler_params=pltpu.CompilerParams(
            dimension_semantics=("parallel", "parallel", "arbitrary"),
            vmem_limit_bytes=vmem_limit,
        ),
    )(*operands)

    return out_p[:M, :N]


def graph_convolution(x, adj, weight, bias=None, *, compute_dtype=jnp.bfloat16,
                      precision=None, tm=512, tn=256, tk=1024, b_resident=None):
    """GraphConvolution.forward: adj @ (x @ weight) + bias (output in f32)."""
    support_dtype = compute_dtype if compute_dtype is not None else jnp.float32
    # support = x @ W -- computed once; emitted directly in the compute dtype
    # so the aggregation matmul reads it with no extra cast/copy.
    support = pallas_matmul(x, weight, bias=None, tm=tm, tn=tn, tk=tk,
                            compute_dtype=compute_dtype, out_dtype=support_dtype,
                            precision=precision, b_resident=b_resident)
    # output = adj @ support + bias   (f32 epilogue / f32 output)
    return pallas_matmul(adj, support, bias=bias, tm=tm, tn=tn, tk=tk,
                         compute_dtype=compute_dtype, out_dtype=jnp.float32,
                         precision=precision, b_resident=b_resident)


if __name__ == "__main__":
    # Small shapes, deliberately non-multiples of 8/128 to exercise padding.
    N_nodes, in_features, out_features = 192, 200, 96

    key = jax.random.PRNGKey(0)
    kx, ka, kw, kb = jax.random.split(key, 4)

    x = jax.random.normal(kx, (N_nodes, in_features), dtype=jnp.float32)

    # Row-normalized dense adjacency with self loops (typical GCN input).
    a = (jax.random.uniform(ka, (N_nodes, N_nodes)) > 0.9).astype(jnp.float32)
    a = jnp.maximum(a, a.T) + jnp.eye(N_nodes, dtype=jnp.float32)
    adj = a / jnp.sum(a, axis=1, keepdims=True)

    # reset_parameters(): uniform(-stdv, stdv), stdv = 1 / sqrt(out_features).
    stdv = 1.0 / math.sqrt(out_features)
    weight = jax.random.uniform(kw, (in_features, out_features), jnp.float32,
                                -stdv, stdv)
    bias = jax.random.uniform(kb, (out_features,), jnp.float32, -stdv, stdv)

    hp = lax.Precision.HIGHEST
    ref_support = jnp.dot(x, weight, precision=hp)
    ref = jnp.dot(adj, ref_support, precision=hp) + bias
    ref_nobias = jnp.dot(adj, ref_support, precision=hp)

    # 1) Default fast path: bf16 inputs, f32 accumulation, balanced large tiles.
    gcn = jax.jit(lambda xx, aa, ww, bb: graph_convolution(xx, aa, ww, bb))
    out = gcn(x, adj, weight, bias)
    out_nobias = graph_convolution(x, adj, weight, None)
    jax.block_until_ready((out, out_nobias))
    assert out.shape == (N_nodes, out_features)
    assert out.dtype == jnp.float32
    assert jnp.allclose(out, ref, atol=5e-2, rtol=5e-2)
    assert jnp.allclose(out_nobias, ref_nobias, atol=5e-2, rtol=5e-2)

    # 2) Tight numerical validation: f32 compute + HIGHEST precision, small
    #    tiles to force a multi-step k reduction; exercise both the streaming-b
    #    and the VMEM-resident-b (pl.ds slicing) paths.
    out_stream = graph_convolution(
        x, adj, weight, bias, compute_dtype=jnp.float32,
        precision=lax.Precision.HIGHEST, tm=64, tn=128, tk=128,
        b_resident=False)
    out_resident = graph_convolution(
        x, adj, weight, bias, compute_dtype=jnp.float32,
        precision=lax.Precision.HIGHEST, tm=64, tn=128, tk=128,
        b_resident=True)
    jax.block_until_ready((out_stream, out_resident))
    assert jnp.allclose(out_stream, ref, atol=1e-4, rtol=1e-4)
    assert jnp.allclose(out_resident, ref, atol=1e-4, rtol=1e-4)

    print("KERNEL_OK")
</pallas_src>

<mosaic_0001>
module attributes {stable_mosaic.version = 11 : i64} {
  func.func @kernel(%arg0: i32, %arg1: i32, %arg2: i32, %arg3: memref<96x256xbf16, #tpu.memory_space<vmem>>, %arg4: memref<256x128xbf16, #tpu.memory_space<vmem>>, %arg5: memref<96x128xbf16, #tpu.memory_space<vmem>>, %arg6: memref<96x128xf32, #tpu.memory_space<vmem>>) attributes {dimension_semantics = [#tpu.dimension_semantics<parallel>, #tpu.dimension_semantics<parallel>, #tpu.dimension_semantics<arbitrary>], iteration_bounds = array<i64: 2, 1, 1>, scalar_prefetch = 0 : i64, scratch_operands = 1 : i64, tpu.core_type = #tpu.core_type<tc>, window_params = [{transform_indices = @transform_0, window_bounds = array<i64: 96, 256>}, {transform_indices = @transform_1, window_bounds = array<i64: 256, 128>}, {transform_indices = @transform_2, window_bounds = array<i64: 96, 128>}]} {
    %c0_i32 = arith.constant 0 : i32
    %0 = arith.cmpi eq, %arg2, %c0_i32 : i32
    %1 = arith.extui %0 : i1 to i32
    %c0_i32_0 = arith.constant 0 : i32
    %2 = arith.cmpi ne, %1, %c0_i32_0 : i32
    scf.if %2 {
      %cst_10 = arith.constant 0.000000e+00 : f32
      %12 = vector.broadcast %cst_10 : f32 to vector<96x128xf32>
      %c0_11 = arith.constant 0 : index
      %c0_12 = arith.constant 0 : index
      %13 = vector.load %arg6[%c0_11, %c0_12] : memref<96x128xf32, #tpu.memory_space<vmem>>, vector<96x128xf32>
      tpu.vector_store %arg6[%c0_11, %c0_12], %12 {strides = array<i32>} : memref<96x128xf32, #tpu.memory_space<vmem>>, vector<96x128xf32>,
    } else {
    }
    %c0 = arith.constant 0 : index
    %c0_1 = arith.constant 0 : index
    %3 = vector.load %arg4[%c0, %c0_1] : memref<256x128xbf16, #tpu.memory_space<vmem>>, vector<256x128xbf16>
    %c0_2 = arith.constant 0 : index
    %c0_3 = arith.constant 0 : index
    %4 = vector.load %arg6[%c0_2, %c0_3] : memref<96x128xf32, #tpu.memory_space<vmem>>, vector<96x128xf32>
    %c0_4 = arith.constant 0 : index
    %c0_5 = arith.constant 0 : index
    %5 = vector.load %arg3[%c0_4, %c0_5] : memref<96x256xbf16, #tpu.memory_space<vmem>>, vector<96x256xbf16>
    %cst = arith.constant dense<0.000000e+00> : vector<96x128xf32>
    %6 = tpu.matmul %5, %3, %cst {dimension_numbers = #tpu.dot_dimension_numbers<[1], [0], [0], [1], [0, 0, 1, 1], [], []>} : vector<96x256xbf16>, vector<256x128xbf16>, vector<96x128xf32> -> vector<96x128xf32>
    %7 = arith.addf %4, %6 : vector<96x128xf32>
    %c0_6 = arith.constant 0 : index
    %c0_7 = arith.constant 0 : index
    %8 = vector.load %arg6[%c0_6, %c0_7] : memref<96x128xf32, #tpu.memory_space<vmem>>, vector<96x128xf32>
    tpu.vector_store %arg6[%c0_6, %c0_7], %7 {strides = array<i32>} : memref<96x128xf32, #tpu.memory_space<vmem>>, vector<96x128xf32>,
    %c0_i32_8 = arith.constant 0 : i32
    %9 = arith.cmpi eq, %arg2, %c0_i32_8 : i32
    %10 = arith.extui %9 : i1 to i32
    %c0_i32_9 = arith.constant 0 : i32
    %11 = arith.cmpi ne, %10, %c0_i32_9 : i32
    scf.if %11 {
      %c0_10 = arith.constant 0 : index
      %c0_11 = arith.constant 0 : index
      %12 = vector.load %arg6[%c0_10, %c0_11] : memref<96x128xf32, #tpu.memory_space<vmem>>, vector<96x128xf32>
      %13 = arith.truncf %12 : vector<96x128xf32> to vector<96x128xbf16>
      %c0_12 = arith.constant 0 : index
      %c0_13 = arith.constant 0 : index
      %14 = vector.load %arg5[%c0_12, %c0_13] : memref<96x128xbf16, #tpu.memory_space<vmem>>, vector<96x128xbf16>
      tpu.vector_store %arg5[%c0_12, %c0_13], %13 {strides = array<i32>} : memref<96x128xbf16, #tpu.memory_space<vmem>>, vector<96x128xbf16>,
    } else {
    }
    return
  }
  func.func @transform_0(%arg0: i32, %arg1: i32, %arg2: i32) -> (i32, i32) {
    %c0_i32 = arith.constant 0 : i32
    return %arg0, %arg2 : i32, i32
  }
  func.func @transform_1(%arg0: i32, %arg1: i32, %arg2: i32) -> (i32, i32) {
    %c0_i32 = arith.constant 0 : i32
    return %arg2, %arg1 : i32, i32
  }
  func.func @transform_2(%arg0: i32, %arg1: i32, %arg2: i32) -> (i32, i32) {
    %c0_i32 = arith.constant 0 : i32
    return %arg0, %arg1 : i32, i32
  }
}

module attributes {stable_mosaic.version = 11 : i64} {
  func.func @kernel(%arg0: i32, %arg1: i32, %arg2: i32, %arg3: memref<96x256xbf16, #tpu.memory_space<vmem>>, %arg4: memref<256x128xbf16, #tpu.memory_space<vmem>>, %arg5: memref<1x128xf32, #tpu.memory_space<vmem>>, %arg6: memref<96x128xf32, #tpu.memory_space<vmem>>, %arg7: memref<96x128xf32, #tpu.memory_space<vmem>>) attributes {dimension_semantics = [#tpu.dimension_semantics<parallel>, #tpu.dimension_semantics<parallel>, #tpu.dimension_semantics<arbitrary>], iteration_bounds = array<i64: 2, 1, 1>, scalar_prefetch = 0 : i64, scratch_operands = 1 : i64, tpu.core_type = #tpu.core_type<tc>, window_params = [{transform_indices = @transform_0, window_bounds = array<i64: 96, 256>}, {transform_indices = @transform_1, window_bounds = array<i64: 256, 128>}, {transform_indices = @transform_2, window_bounds = array<i64: 1, 128>}, {transform_indices = @transform_3, window_bounds = array<i64: 96, 128>}]} {
    %c0_i32 = arith.constant 0 : i32
    %0 = arith.cmpi eq, %arg2, %c0_i32 : i32
    %1 = arith.extui %0 : i1 to i32
    %c0_i32_0 = arith.constant 0 : i32
    %2 = arith.cmpi ne, %1, %c0_i32_0 : i32
    scf.if %2 {
      %cst_10 = arith.constant 0.000000e+00 : f32
      %12 = vector.broadcast %cst_10 : f32 to vector<96x128xf32>
      %c0_11 = arith.constant 0 : index
      %c0_12 = arith.constant 0 : index
      %13 = vector.load %arg7[%c0_11, %c0_12] : memref<96x128xf32, #tpu.memory_space<vmem>>, vector<96x128xf32>
      tpu.vector_store %arg7[%c0_11, %c0_12], %12 {strides = array<i32>} : memref<96x128xf32, #tpu.memory_space<vmem>>, vector<96x128xf32>,
    } else {
    }
    %c0 = arith.constant 0 : index
    %c0_1 = arith.constant 0 : index
    %3 = vector.load %arg4[%c0, %c0_1] : memref<256x128xbf16, #tpu.memory_space<vmem>>, vector<256x128xbf16>
    %c0_2 = arith.constant 0 : index
    %c0_3 = arith.constant 0 : index
    %4 = vector.load %arg7[%c0_2, %c0_3] : memref<96x128xf32, #tpu.memory_space<vmem>>, vector<96x128xf32>
    %c0_4 = arith.constant 0 : index
    %c0_5 = arith.constant 0 : index
    %5 = vector.load %arg3[%c0_4, %c0_5] : memref<96x256xbf16, #tpu.memory_space<vmem>>, vector<96x256xbf16>
    %cst = arith.constant dense<0.000000e+00> : vector<96x128xf32>
    %6 = tpu.matmul %5, %3, %cst {dimension_numbers = #tpu.dot_dimension_numbers<[1], [0], [0], [1], [0, 0, 1, 1], [], []>} : vector<96x256xbf16>, vector<256x128xbf16>, vector<96x128xf32> -> vector<96x128xf32>
    %7 = arith.addf %4, %6 : vector<96x128xf32>
    %c0_6 = arith.constant 0 : index
    %c0_7 = arith.constant 0 : index
    %8 = vector.load %arg7[%c0_6, %c0_7] : memref<96x128xf32, #tpu.memory_space<vmem>>, vector<96x128xf32>
    tpu.vector_store %arg7[%c0_6, %c0_7], %7 {strides = array<i32>} : memref<96x128xf32, #tpu.memory_space<vmem>>, vector<96x128xf32>,
    %c0_i32_8 = arith.constant 0 : i32
    %9 = arith.cmpi eq, %arg2, %c0_i32_8 : i32
    %10 = arith.extui %9 : i1 to i32
    %c0_i32_9 = arith.constant 0 : i32
    %11 = arith.cmpi ne, %10, %c0_i32_9 : i32
    scf.if %11 {
      %c0_10 = arith.constant 0 : index
      %c0_11 = arith.constant 0 : index
      %12 = vector.load %arg7[%c0_10, %c0_11] : memref<96x128xf32, #tpu.memory_space<vmem>>, vector<96x128xf32>
      %c0_12 = arith.constant 0 : index
      %c0_13 = arith.constant 0 : index
      %13 = vector.load %arg5[%c0_12, %c0_13] : memref<1x128xf32, #tpu.memory_space<vmem>>, vector<1x128xf32>
      %14 = vector.broadcast %13 : vector<1x128xf32> to vector<96x128xf32>
      %15 = arith.addf %12, %14 : vector<96x128xf32>
      %c0_14 = arith.constant 0 : index
      %c0_15 = arith.constant 0 : index
      %16 = vector.load %arg6[%c0_14, %c0_15] : memref<96x128xf32, #tpu.memory_space<vmem>>, vector<96x128xf32>
      tpu.vector_store %arg6[%c0_14, %c0_15], %15 {strides = array<i32>} : memref<96x128xf32, #tpu.memory_space<vmem>>, vector<96x128xf32>,
    } else {
    }
    return
  }
  func.func @transform_0(%arg0: i32, %arg1: i32, %arg2: i32) -> (i32, i32) {
    %c0_i32 = arith.constant 0 : i32
    return %arg0, %arg2 : i32, i32
  }
  func.func @transform_1(%arg0: i32, %arg1: i32, %arg2: i32) -> (i32, i32) {
    %c0_i32 = arith.constant 0 : i32
    return %arg2, %arg1 : i32, i32
  }
  func.func @transform_2(%arg0: i32, %arg1: i32, %arg2: i32) -> (i32, i32) {
    %c0_i32 = arith.constant 0 : i32
    %c0_i32_0 = arith.constant 0 : i32
    return %c0_i32, %arg1 : i32, i32
  }
  func.func @transform_3(%arg0: i32, %arg1: i32, %arg2: i32) -> (i32, i32) {
    %c0_i32 = arith.constant 0 : i32
    return %arg0, %arg1 : i32, i32
  }
}

</mosaic_0001>

<llo_original>
// kernel: _lambda_.2
$region0: #{_lambda_.2}
  #allocation0 [shape = 'u32[]', space=smem, size = 0x4, offset = 0x4, fixed_abs, tag = 'smem constant byte address 0x4 - core index']
  #allocation1 [shape = 'u32[72,128]{1,0:T(1,128)}', space=vmem, size = 0x9000, scoped, tag = 'internal scratch']
  #allocation2 [shape = 'f32[96,128]{1,0:T(8,128)}', space=vmem, size = 0xc000, scoped, tag = 'scratch operand']
  %s0 = inlined_call_operand.vmem [shape: bf16[192,256], index: 0, kind: input, shape index: {}]
  %s1 = inlined_call_operand.vmem [shape: bf16[256,128], index: 1, kind: input, shape index: {}]
  %s2 = inlined_call_operand.vmem [shape: bf16[192,128], index: 2, kind: output, shape index: {}]
  %s3 = sld [smem:[#allocation0]]
  $region49: #{_lambda_.2} parent=0
    _
  %s5 = ssub.s32 1, %s3
  %s6 = scalar_select 0, %s5, %s3
  loop: start=0, step=1, limit=4
  $region2: #{_lambda_.2} parent=0 // loop_pre_header
    _
  $region3: #{_lambda_.2} parent=0 // loop_header
    %s8 = sphi 0, %s12
    %p9 = scmp.ge.s32.totalorder %s8, 4
    %s15 = sphi 0, %s34
    %s16 = sphi 0, %s30
    %s17 = sphi 0, %s26
    %s18 = sphi 0, %s15
    %s19 = sphi 0, %s16
    %s20 = sphi 0, %s17
    %s21 = sphi 0, %s18
    %s22 = sphi 0, %s19
    %s23 = sphi 0, %s20
    %s39 = sphi 0, %s41
    %s42 = sphi 0, %s39
    %s43 = sphi 0, %s42
    %s59 = sphi 0, %s43
    %s67 = sphi 0, %s69
    %s70 = sphi 0, %s67
    %s71 = sphi 0, %s70
    %s87 = sphi 0, %s71
    %s95 = sphi 0, %s97
    %s98 = sphi 0, %s95
    %s99 = sphi 0, %s98
    %s115 = sphi 0, %s99
  $region4: #{_lambda_.2} parent=0 // loop_header_branch
    %11 = sbr.rel (%p9) target = $region8
  $region5: #{_lambda_.2} parent=0 // loop_body
    %s13 = ssub.s32 %s8, 1
    %s14 = ssub.s32 %s8, 2
    %s24 = sadd.s32 1, %s17
    %p25 = scmp.ge.s32.totalorder %s24, 1
    %s26 = scalar_select %p25, 0, %s24
    %s27 = sadd.s32 1, %s16
    %s28 = scalar_select %p25, %s27, %s16
    %p29 = scmp.ge.s32.totalorder %s28, 1
    %s30 = scalar_select %p29, 0, %s28
    %s31 = sadd.s32 1, %s15
    %s32 = scalar_select %p29, %s31, %s15
    %p33 = scmp.ge.s32.totalorder %s32, 2
    %s34 = scalar_select %p33, 0, %s32
    %s35 = ssub.s32 %s15, %s34
    %s36 = ssub.s32 %s17, %s26
    %s37 = sor.u32 %s35, %s36
    %p38 = scmp.eq.s32.totalorder %s37, 0
    %s40 = sadd.s32 %s39, 1
    %s41 = scalar_select %p38, %s39, %s40
    %p44 = pneg %p38
    %p45 = scmp.eq.s32.totalorder %s8, 1
    %p46 = por %p44, %p45
    %p47 = scmp.ne.s32.totalorder %s39, %s42
    %p48 = scmp.eq.s32.totalorder %s8, 0
    %p49 = por %p47, %p48
    %p50 = scmp.ne.s32.totalorder %s39, %s42
    %p51 = scmp.eq.s32.totalorder %s13, 1
    %p52 = por %p50, %p51
    %p53 = scmp.ne.s32.totalorder %s42, %s43
    %p54 = scmp.eq.s32.totalorder %s13, 0
    %p55 = por %p53, %p54
    %p56 = scmp.ne.s32.totalorder %s42, %s43
    %p57 = scmp.eq.s32.totalorder %s14, 1
    %p58 = por %p56, %p57
    %p60 = scmp.ne.s32.totalorder %s43, %s59
    %p61 = scmp.eq.s32.totalorder %s14, 0
    %p62 = por %p60, %p61
    %s63 = ssub.s32 %s17, %s26
    %s64 = ssub.s32 %s16, %s30
    %s65 = sor.u32 %s63, %s64
    %p66 = scmp.eq.s32.totalorder %s65, 0
    %s68 = sadd.s32 %s67, 1
    %s69 = scalar_select %p66, %s67, %s68
    %p72 = pneg %p66
    %p73 = scmp.eq.s32.totalorder %s8, 1
    %p74 = por %p72, %p73
    %p75 = scmp.ne.s32.totalorder %s67, %s70
    %p76 = scmp.eq.s32.totalorder %s8, 0
    %p77 = por %p75, %p76
    %p78 = scmp.ne.s32.totalorder %s67, %s70
    %p79 = scmp.eq.s32.totalorder %s13, 1
    %p80 = por %p78, %p79
    %p81 = scmp.ne.s32.totalorder %s70, %s71
    %p82 = scmp.eq.s32.totalorder %s13, 0
    %p83 = por %p81, %p82
    %p84 = scmp.ne.s32.totalorder %s70, %s71
    %p85 = scmp.eq.s32.totalorder %s14, 1
    %p86 = por %p84, %p85
    %p88 = scmp.ne.s32.totalorder %s71, %s87
    %p89 = scmp.eq.s32.totalorder %s14, 0
    %p90 = por %p88, %p89
    %s91 = ssub.s32 %s15, %s34
    %s92 = ssub.s32 %s16, %s30
    %s93 = sor.u32 %s91, %s92
    %p94 = scmp.eq.s32.totalorder %s93, 0
    %s96 = sadd.s32 %s95, 1
    %s97 = scalar_select %p94, %s95, %s96
    %p100 = pneg %p94
    %p101 = scmp.eq.s32.totalorder %s8, 1
    %p102 = por %p100, %p101
    %p103 = scmp.ne.s32.totalorder %s95, %s98
    %p104 = scmp.eq.s32.totalorder %s8, 0
    %p105 = por %p103, %p104
    %p106 = scmp.ne.s32.totalorder %s95, %s98
    %p107 = scmp.eq.s32.totalorder %s13, 1
    %p108 = por %p106, %p107
    %p109 = scmp.ne.s32.totalorder %s98, %s99
    %p110 = scmp.eq.s32.totalorder %s13, 0
    %p111 = por %p109, %p110
    %p112 = scmp.ne.s32.totalorder %s98, %s99
    %p113 = scmp.eq.s32.totalorder %s14, 1
    %p114 = por %p112, %p113
    %p116 = scmp.ne.s32.totalorder %s99, %s115
    %p117 = scmp.eq.s32.totalorder %s14, 0
    %p118 = por %p116, %p117
    %p119 = scmp.le.s32.totalorder 1, %s8
    %p120 = scmp.lt.s32.totalorder %s8, 3
    %p121 = pnand %p119, %p120
    %p122 = pneg %p121
    // Predicated region
    $region9: #{_lambda_.2} parent=5 // pred_check
      _
    $region10: #{_lambda_.2} parent=5 // pred_check_branch
      %124 = sbr.rel (%p121) target = $region12
    $region11: #{_lambda_.2} parent=5 // pred_region
      %s125 = ssub.s32 %s8, 1
      // Predicated region
      $region13: #{_lambda_.2} parent=11 // pred_check
        %p126 = pneg %p83
      $region14: #{_lambda_.2} parent=11 // pred_check_branch
        %128 = sbr.rel (%p126) target = $region16
      $region15: #{_lambda_.2} parent=11 // pred_region
        %s129 = smul.u32 32, %s20
        %p130 = scmp.lt.s32.totalorder %s129, 31
        %s131 = scalar_select %p130, %s129, 31
        %p132 = scmp.lt.s32.totalorder %s19, 0
        %s133 = scalar_select %p132, %s19, 0
        %s134 = sadd.s32 %s133, %s131
        %s135 = smul.addr %s134, 4
        %s136 = scalar_lea.vmem %s1, %s135
        %s137 = smul.u32 32, %s20
      $region16: #{_lambda_.2} parent=11 // pred_fallthru
        _
    $region12: #{_lambda_.2} parent=5 // pred_fallthru
      _
    %p138 = scmp.lt.s32.totalorder %s8, 2
    // Predicated region
    $region17: #{_lambda_.2} parent=5 // pred_check
      %p139 = pneg %p138
    $region18: #{_lambda_.2} parent=5 // pred_check_branch
      %141 = sbr.rel (%p139) target = $region20
    $region19: #{_lambda_.2} parent=5 // pred_region
      // Predicated region
      $region21: #{_lambda_.2} parent=19 // pred_check
        %p142 = pneg %p49
      $region22: #{_lambda_.2} parent=19 // pred_check_branch
        %144 = sbr.rel (%p142) target = $region24
      $region23: #{_lambda_.2} parent=19 // pred_region
        %s145 = smul.u32 12, %s15
        %s146 = smul.u32 2, %s17
        %p147 = scmp.lt.s32.totalorder %s145, 23
        %s148 = scalar_select %p147, %s145, 23
        %p149 = scmp.lt.s32.totalorder %s146, 1
        %s150 = scalar_select %p149, %s146, 1
        %s151 = smul.addr %s148, 2
        %s152 = sadd.s32 %s150, %s151
        %s153 = smul.addr %s152, 4
        %s154 = scalar_lea.vmem %s0, %s153
        %s155 = smul.u32 12, %s15
        %s156 = smul.u32 2, %s17
      $region24: #{_lambda_.2} parent=19 // pred_fallthru
        _
    $region20: #{_lambda_.2} parent=5 // pred_fallthru
      _
    %p157 = scmp.le.s32.totalorder 1, %s8
    %p158 = scmp.lt.s32.totalorder %s8, 3
    %p159 = pnand %p157, %p158
    %p160 = pneg %p159
    // Predicated region
    $region25: #{_lambda_.2} parent=5 // pred_check
      _
    $region26: #{_lambda_.2} parent=5 // pred_check_branch
      %162 = sbr.rel (%p159) target = $region28
    $region27: #{_lambda_.2} parent=5 // pred_region
      %s163 = ssub.s32 %s8, 1
      %s164 = smul.u32 12, %s18
      %s165 = smul.u32 2, %s20
      %p166 = scmp.lt.s32.totalorder %s164, 23
      %s167 = scalar_select %p166, %s164, 23
      %p168 = scmp.lt.s32.totalorder %s165, 1
      %s169 = scalar_select %p168, %s165, 1
      %s170 = smul.addr %s167, 2
      %s171 = sadd.s32 %s169, %s170
      %s172 = smul.addr %s171, 4
      %s173 = scalar_lea.vmem %s0, %s172
      %p174 = pneg %p55
      %p175 = pneg %p52
      %s176 = smul.u32 32, %s20
      %p177 = scmp.lt.s32.totalorder %s176, 31
      %s178 = scalar_select %p177, %s176, 31
      %p179 = scmp.lt.s32.totalorder %s19, 0
      %s180 = scalar_select %p179, %s19, 0
      %s181 = sadd.s32 %s180, %s178
      %s182 = smul.addr %s181, 4
      %s183 = scalar_lea.vmem %s1, %s182
      %p184 = pneg %p83
      %p185 = pneg %p80
      %p186 = pneg %p111
      %p187 = pneg %p108
      %s188 = smul.u32 12, %s18
      %p189 = scmp.lt.s32.totalorder %s188, 23
      %s190 = scalar_select %p189, %s188, 23
      %p191 = scmp.lt.s32.totalorder %s19, 0
      %s192 = scalar_select %p191, %s19, 0
      %s193 = sadd.s32 %s192, %s190
      %s194 = smul.addr %s193, 4
      %s195 = scalar_lea.vmem %s2, %s194
      %s196 = smul.u32 12, %s18
      %s197 = smul.u32 2, %s20
      %p198 = scmp.lt.s32.totalorder %s196, 23
      %s199 = scalar_select %p198, %s196, 23
      %p200 = scmp.lt.s32.totalorder %s197, 1
      %s201 = scalar_select %p200, %s197, 1
      %s202 = smul.addr %s199, 2
      %s203 = sadd.s32 %s201, %s202
      %s204 = smul.addr %s203, 4
      %s205 = scalar_lea.vmem %s0, %s204
      %s206 = smul.u32 12, %s18
      %s207 = smul.u32 2, %s20
      %s208 = smul.u32 32, %s20
      %p209 = scmp.lt.s32.totalorder %s208, 31
      %s210 = scalar_select %p209, %s208, 31
      %p211 = scmp.lt.s32.totalorder %s19, 0
      %s212 = scalar_select %p211, %s19, 0
      %s213 = sadd.s32 %s212, %s210
      %s214 = smul.addr %s213, 4
      %s215 = scalar_lea.vmem %s1, %s214
      %s216 = smul.u32 32, %s20
      %s217 = smul.u32 12, %s18
      %p218 = scmp.lt.s32.totalorder %s217, 23
      %s219 = scalar_select %p218, %s217, 23
      %p220 = scmp.lt.s32.totalorder %s19, 0
      %s221 = scalar_select %p220, %s19, 0
      %s222 = sadd.s32 %s221, %s219
      %s223 = smul.addr %s222, 4
      %s224 = scalar_lea.vmem %s2, %s223
      %s225 = smul.u32 12, %s18
      %p226 = scmp.eq.s32.totalorder %s20, 0
      // Predicated region
      $region29: #{_lambda_.2} parent=27 // pred_check
        %p227 = pneg %p226
      $region30: #{_lambda_.2} parent=27 // pred_check_branch
        %229 = sbr.rel (%p227) target = $region32
      $region31: #{_lambda_.2} parent=27 // pred_region
        %230 = vst [vmem:[#allocation2] sm:$0xff] 0.0
        %231 = vst [vmem:[#allocation2 + $0x8] sm:$0xff] 0.0
        %232 = vst [vmem:[#allocation2 + $0x10] sm:$0xff] 0.0
        %233 = vst [vmem:[#allocation2 + $0x18] sm:$0xff] 0.0
        %234 = vst [vmem:[#allocation2 + $0x20] sm:$0xff] 0.0
        %235 = vst [vmem:[#allocation2 + $0x28] sm:$0xff] 0.0
        %236 = vst [vmem:[#allocation2 + $0x30] sm:$0xff] 0.0
        %237 = vst [vmem:[#allocation2 + $0x38] sm:$0xff] 0.0
        %238 = vst [vmem:[#allocation2 + $0x40] sm:$0xff] 0.0
        %239 = vst [vmem:[#allocation2 + $0x48] sm:$0xff] 0.0
        %240 = vst [vmem:[#allocation2 + $0x50] sm:$0xff] 0.0
        %241 = vst [vmem:[#allocation2 + $0x58] sm:$0xff] 0.0
      $region32: #{_lambda_.2} parent=27 // pred_fallthru
        _
      %v242 = vld [vmem:[%s215] sm:$0xf]
      %v243 = vld [vmem:[%s215 + $0x4] sm:$0xf]
      %v244 = vld [vmem:[%s215 + $0x8] sm:$0xf]
      %v245 = vld [vmem:[%s215 + $0xc] sm:$0xf]
      %v246 = vld [vmem:[%s215 + $0x10] sm:$0xf]
      %v247 = vld [vmem:[%s215 + $0x14] sm:$0xf]
      %v248 = vld [vmem:[%s215 + $0x18] sm:$0xf]
      %v249 = vld [vmem:[%s215 + $0x1c] sm:$0xf]
      %v250 = vld [vmem:[%s215 + $0x20] sm:$0xf]
      %v251 = vld [vmem:[%s215 + $0x24] sm:$0xf]
      %v252 = vld [vmem:[%s215 + $0x28] sm:$0xf]
      %v253 = vld [vmem:[%s215 + $0x2c] sm:$0xf]
      %v254 = vld [vmem:[%s215 + $0x30] sm:$0xf]
      %v255 = vld [vmem:[%s215 + $0x34] sm:$0xf]
      %v256 = vld [vmem:[%s215 + $0x38] sm:$0xf]
      %v257 = vld [vmem:[%s215 + $0x3c] sm:$0xf]
      %v258 = vld [vmem:[%s215 + $0x40] sm:$0xf]
      %v259 = vld [vmem:[%s215 + $0x44] sm:$0xf]
      %v260 = vld [vmem:[%s215 + $0x48] sm:$0xf]
      %v261 = vld [vmem:[%s215 + $0x4c] sm:$0xf]
      %v262 = vld [vmem:[%s215 + $0x50] sm:$0xf]
      %v263 = vld [vmem:[%s215 + $0x54] sm:$0xf]
      %v264 = vld [vmem:[%s215 + $0x58] sm:$0xf]
      %v265 = vld [vmem:[%s215 + $0x5c] sm:$0xf]
      %v266 = vld [vmem:[%s215 + $0x60] sm:$0xf]
      %v267 = vld [vmem:[%s215 + $0x64] sm:$0xf]
      %v268 = vld [vmem:[%s215 + $0x68] sm:$0xf]
      %v269 = vld [vmem:[%s215 + $0x6c] sm:$0xf]
      %v270 = vld [vmem:[%s215 + $0x70] sm:$0xf]
      %v271 = vld [vmem:[%s215 + $0x74] sm:$0xf]
      %v272 = vld [vmem:[%s215 + $0x78] sm:$0xf]
      %v273 = vld [vmem:[%s215 + $0x7c] sm:$0xf]
      %v274 = vld [vmem:[#allocation2] sm:$0xff]
      %v275 = vld [vmem:[#allocation2 + $0x8] sm:$0xff]
      %v276 = vld [vmem:[#allocation2 + $0x10] sm:$0xff]
      %v277 = vld [vmem:[#allocation2 + $0x18] sm:$0xff]
      %v278 = vld [vmem:[#allocation2 + $0x20] sm:$0xff]
      %v279 = vld [vmem:[#allocation2 + $0x28] sm:$0xff]
      %v280 = vld [vmem:[#allocation2 + $0x30] sm:$0xff]
      %v281 = vld [vmem:[#allocation2 + $0x38] sm:$0xff]
      %v282 = vld [vmem:[#allocation2 + $0x40] sm:$0xff]
      %v283 = vld [vmem:[#allocation2 + $0x48] sm:$0xff]
      %v284 = vld [vmem:[#allocation2 + $0x50] sm:$0xff]
      %v285 = vld [vmem:[#allocation2 + $0x58] sm:$0xff]
      %v286 = vld [vmem:[%s205] sm:$0xff]
      %v287 = vld [vmem:[%s205 + $0x8] sm:$0xff]
      %v288 = vld [vmem:[%s205 + $0x10] sm:$0xff]
      %v289 = vld [vmem:[%s205 + $0x18] sm:$0xff]
      %v290 = vld [vmem:[%s205 + $0x20] sm:$0xff]
      %v291 = vld [vmem:[%s205 + $0x28] sm:$0xff]
      %v292 = vld [vmem:[%s205 + $0x30] sm:$0xff]
      %v293 = vld [vmem:[%s205 + $0x38] sm:$0xff]
      %v294 = vld [vmem:[%s205 + $0x40] sm:$0xff]
      %v295 = vld [vmem:[%s205 + $0x48] sm:$0xff]
      %v296 = vld [vmem:[%s205 + $0x50] sm:$0xff]
      %v297 = vld [vmem:[%s205 + $0x58] sm:$0xff]
      %v310 = vunpack.c.l.b16 %v286
      %v311 = vunpack.c.h.b16 %v286
      %v312 = vunpack.c.l.b16 %v287
      %v313 = vunpack.c.h.b16 %v287
      %v314 = vunpack.c.l.b16 %v288
      %v315 = vunpack.c.h.b16 %v288
      %v316 = vunpack.c.l.b16 %v289
      %v317 = vunpack.c.h.b16 %v289
      %v318 = vunpack.c.l.b16 %v290
      %v319 = vunpack.c.h.b16 %v290
      %v320 = vunpack.c.l.b16 %v291
      %v321 = vunpack.c.h.b16 %v291
      %v322 = vunpack.c.l.b16 %v292
      %v323 = vunpack.c.h.b16 %v292
      %v324 = vunpack.c.l.b16 %v293
      %v325 = vunpack.c.h.b16 %v293
      %v326 = vunpack.c.l.b16 %v294
      %v327 = vunpack.c.h.b16 %v294
      %v328 = vunpack.c.l.b16 %v295
      %v329 = vunpack.c.h.b16 %v295
      %v330 = vunpack.c.l.b16 %v296
      %v331 = vunpack.c.h.b16 %v296
      %v332 = vunpack.c.l.b16 %v297
      %v333 = vunpack.c.h.b16 %v297
      %v334 = vpack.c.b16 %v312, %v310
      %v335 = vpack.c.b16 %v313, %v311
      %v336 = vpack.c.b16 %v316, %v314
      %v337 = vpack.c.b16 %v317, %v315
      %v338 = vpack.c.b16 %v320, %v318
      %v339 = vpack.c.b16 %v321, %v319
      %v340 = vpack.c.b16 %v324, %v322
      %v341 = vpack.c.b16 %v325, %v323
      %v342 = vpack.c.b16 %v328, %v326
      %v343 = vpack.c.b16 %v329, %v327
      %v344 = vpack.c.b16 %v332, %v330
      %v345 = vpack.c.b16 %v333, %v331
      %v390 = vunpack.c.l.b16 %v242
      %v391 = vunpack.c.l.b16 %v243
      %v392 = vunpack.c.l.b16 %v244
      %v393 = vunpack.c.l.b16 %v245
      %v394 = vunpack.c.l.b16 %v246
      %v395 = vunpack.c.l.b16 %v247
      %v396 = vunpack.c.l.b16 %v248
      %v397 = vunpack.c.l.b16 %v249
      %v398 = vunpack.c.l.b16 %v250
      %v399 = vunpack.c.l.b16 %v251
      %v400 = vunpack.c.l.b16 %v252
      %v401 = vunpack.c.l.b16 %v253
      %v402 = vunpack.c.l.b16 %v254
      %v403 = vunpack.c.l.b16 %v255
      %v404 = vunpack.c.l.b16 %v256
      %v405 = vunpack.c.l.b16 %v257
      %v406 = vunpack.c.l.b16 %v258
      %v407 = vunpack.c.l.b16 %v259
      %v408 = vunpack.c.l.b16 %v260
      %v409 = vunpack.c.l.b16 %v261
      %v410 = vunpack.c.l.b16 %v262
      %v411 = vunpack.c.l.b16 %v263
      %v412 = vunpack.c.l.b16 %v264
      %v413 = vunpack.c.l.b16 %v265
      %v414 = vunpack.c.l.b16 %v266
      %v415 = vunpack.c.l.b16 %v267
      %v416 = vunpack.c.l.b16 %v268
      %v417 = vunpack.c.l.b16 %v269
      %v418 = vunpack.c.l.b16 %v270
      %v419 = vunpack.c.l.b16 %v271
      %v420 = vunpack.c.l.b16 %v272
      %v421 = vunpack.c.l.b16 %v273
      %v422 = vpack.c.b16 %v391, %v390
      %v423 = vpack.c.b16 %v393, %v392
      %v424 = vpack.c.b16 %v395, %v394
      %v425 = vpack.c.b16 %v397, %v396
      %v426 = vpack.c.b16 %v399, %v398
      %v427 = vpack.c.b16 %v401, %v400
      %v428 = vpack.c.b16 %v403, %v402
      %v429 = vpack.c.b16 %v405, %v404
      %v430 = vpack.c.b16 %v407, %v406
      %v431 = vpack.c.b16 %v409, %v408
      %v432 = vpack.c.b16 %v411, %v410
      %v433 = vpack.c.b16 %v413, %v412
      %v434 = vpack.c.b16 %v415, %v414
      %v435 = vpack.c.b16 %v417, %v416
      %v436 = vpack.c.b16 %v419, %v418
      %v437 = vpack.c.b16 %v421, %v420
      %454 = vmatpush.bf16.msra.mxu0 %v429
      %455 = vmatpush.bf16.msra.mxu0 %v428
      %456 = vmatpush.bf16.msra.mxu0 %v427
      %457 = vmatpush.bf16.msra.mxu0 %v426
      %458 = vmatpush.bf16.msra.mxu0 %v425
      %459 = vmatpush.bf16.msra.mxu0 %v424
      %460 = vmatpush.bf16.msra.mxu0 %v423
      %461 = vmatpush.bf16.msra.mxu0 %v422
      %462 = vmatmul.bf16.gmra.mxu0 %v334
      %v463 = vpop.f32.mrf.mxu0
      %v464 = vadd.f32 0.0, %v463
      %v465 = vpop.f32.mrf.mxu0
      %v466 = vadd.f32 0.0, %v465
      %467 = vmatmul.bf16.gmra.mxu0 %v336
      %v468 = vpop.f32.mrf.mxu0
      %v469 = vadd.f32 0.0, %v468
      %v470 = vpop.f32.mrf.mxu0
      %v471 = vadd.f32 0.0, %v470
      %472 = vmatmul.bf16.gmra.mxu0 %v338
      %v473 = vpop.f32.mrf.mxu0
      %v474 = vadd.f32 0.0, %v473
      %v475 = vpop.f32.mrf.mxu0
      %v476 = vadd.f32 0.0, %v475
      %477 = vmatmul.bf16.gmra.mxu0 %v340
      %v478 = vpop.f32.mrf.mxu0
      %v479 = vadd.f32 0.0, %v478
      %v480 = vpop.f32.mrf.mxu0
      %v481 = vadd.f32 0.0, %v480
      %482 = vmatmul.bf16.gmra.mxu0 %v342
      %v483 = vpop.f32.mrf.mxu0
      %v484 = vadd.f32 0.0, %v483
      %v485 = vpop.f32.mrf.mxu0
      %v486 = vadd.f32 0.0, %v485
      %487 = vmatmul.bf16.gmra.mxu0 %v344
      %v488 = vpop.f32.mrf.mxu0
      %v489 = vadd.f32 0.0, %v488
      %v490 = vpop.f32.mrf.mxu0
      %v491 = vadd.f32 0.0, %v490
      %492 = vdwg.mxu0
      %493 = vmatpush.bf16.msra.mxu0 %v437
      %494 = vmatpush.bf16.msra.mxu0 %v436
      %495 = vmatpush.bf16.msra.mxu0 %v435
      %496 = vmatpush.bf16.msra.mxu0 %v434
      %497 = vmatpush.bf16.msra.mxu0 %v433
      %498 = vmatpush.bf16.msra.mxu0 %v432
      %499 = vmatpush.bf16.msra.mxu0 %v431
      %500 = vmatpush.bf16.msra.mxu0 %v430
      %501 = vmatmul.bf16.gmra.mxu0 %v335
      %v502 = vpop.f32.mrf.mxu0
      %v503 = vadd.f32 %v464, %v502
      %v504 = vpop.f32.mrf.mxu0
      %v505 = vadd.f32 %v466, %v504
      %506 = vmatmul.bf16.gmra.mxu0 %v337
      %v507 = vpop.f32.mrf.mxu0
      %v508 = vadd.f32 %v469, %v507
      %v509 = vpop.f32.mrf.mxu0
      %v510 = vadd.f32 %v471, %v509
      %511 = vmatmul.bf16.gmra.mxu0 %v339
      %v512 = vpop.f32.mrf.mxu0
      %v513 = vadd.f32 %v474, %v512
      %v514 = vpop.f32.mrf.mxu0
      %v515 = vadd.f32 %v476, %v514
      %516 = vmatmul.bf16.gmra.mxu0 %v341
      %v517 = vpop.f32.mrf.mxu0
      %v518 = vadd.f32 %v479, %v517
      %v519 = vpop.f32.mrf.mxu0
      %v520 = vadd.f32 %v481, %v519
      %521 = vmatmul.bf16.gmra.mxu0 %v343
      %v522 = vpop.f32.mrf.mxu0
      %v523 = vadd.f32 %v484, %v522
      %v524 = vpop.f32.mrf.mxu0
      %v525 = vadd.f32 %v486, %v524
      %526 = vmatmul.bf16.gmra.mxu0 %v345
      %v527 = vpop.f32.mrf.mxu0
      %v528 = vadd.f32 %v489, %v527
      %v529 = vpop.f32.mrf.mxu0
      %v530 = vadd.f32 %v491, %v529
      %531 = vdwg.mxu0
      %v532 = vadd.f32 %v274, %v503
      %v533 = vadd.f32 %v275, %v505
      %v534 = vadd.f32 %v276, %v508
      %v535 = vadd.f32 %v277, %v510
      %v536 = vadd.f32 %v278, %v513
      %v537 = vadd.f32 %v279, %v515
      %v538 = vadd.f32 %v280, %v518
      %v539 = vadd.f32 %v281, %v520
      %v540 = vadd.f32 %v282, %v523
      %v541 = vadd.f32 %v283, %v525
      %v542 = vadd.f32 %v284, %v528
      %v543 = vadd.f32 %v285, %v530
      %544 = vst [vmem:[#allocation2] sm:$0xff] %v532
      %545 = vst [vmem:[#allocation2 + $0x8] sm:$0xff] %v533
      %546 = vst [vmem:[#allocation2 + $0x10] sm:$0xff] %v534
      %547 = vst [vmem:[#allocation2 + $0x18] sm:$0xff] %v535
      %548 = vst [vmem:[#allocation2 + $0x20] sm:$0xff] %v536
      %549 = vst [vmem:[#allocation2 + $0x28] sm:$0xff] %v537
      %550 = vst [vmem:[#allocation2 + $0x30] sm:$0xff] %v538
      %551 = vst [vmem:[#allocation2 + $0x38] sm:$0xff] %v539
      %552 = vst [vmem:[#allocation2 + $0x40] sm:$0xff] %v540
      %553 = vst [vmem:[#allocation2 + $0x48] sm:$0xff] %v541
      %554 = vst [vmem:[#allocation2 + $0x50] sm:$0xff] %v542
      %555 = vst [vmem:[#allocation2 + $0x58] sm:$0xff] %v543
      // Predicated region
      $region33: #{_lambda_.2} parent=27 // pred_check
        %p556 = pneg %p226
      $region34: #{_lambda_.2} parent=27 // pred_check_branch
        %558 = sbr.rel (%p556) target = $region36
      $region35: #{_lambda_.2} parent=27 // pred_region
        %v559 = vld [vmem:[#allocation2] sm:$0xff]
        %v560 = vld [vmem:[#allocation2 + $0x8] sm:$0xff]
        %v561 = vld [vmem:[#allocation2 + $0x10] sm:$0xff]
        %v562 = vld [vmem:[#allocation2 + $0x18] sm:$0xff]
        %v563 = vld [vmem:[#allocation2 + $0x20] sm:$0xff]
        %v564 = vld [vmem:[#allocation2 + $0x28] sm:$0xff]
        %v565 = vld [vmem:[#allocation2 + $0x30] sm:$0xff]
        %v566 = vld [vmem:[#allocation2 + $0x38] sm:$0xff]
        %v567 = vld [vmem:[#allocation2 + $0x40] sm:$0xff]
        %v568 = vld [vmem:[#allocation2 + $0x48] sm:$0xff]
        %v569 = vld [vmem:[#allocation2 + $0x50] sm:$0xff]
        %v570 = vld [vmem:[#allocation2 + $0x58] sm:$0xff]
        %v571 = vpack.c.bf16 %v559, %v559
        %v572 = vpack.c.bf16 %v560, %v560
        %v573 = vpack.c.bf16 %v561, %v561
        %v574 = vpack.c.bf16 %v562, %v562
        %v575 = vpack.c.bf16 %v563, %v563
        %v576 = vpack.c.bf16 %v564, %v564
        %v577 = vpack.c.bf16 %v565, %v565
        %v578 = vpack.c.bf16 %v566, %v566
        %v579 = vpack.c.bf16 %v567, %v567
        %v580 = vpack.c.bf16 %v568, %v568
        %v581 = vpack.c.bf16 %v569, %v569
        %v582 = vpack.c.bf16 %v570, %v570
        %583 = vst [vmem:[%s224] sm:$0xf] %v571
        %584 = vst [vmem:[%s224 + $0x4] sm:$0xf] %v572
        %585 = vst [vmem:[%s224 + $0x8] sm:$0xf] %v573
        %586 = vst [vmem:[%s224 + $0xc] sm:$0xf] %v574
        %587 = vst [vmem:[%s224 + $0x10] sm:$0xf] %v575
        %588 = vst [vmem:[%s224 + $0x14] sm:$0xf] %v576
        %589 = vst [vmem:[%s224 + $0x18] sm:$0xf] %v577
        %590 = vst [vmem:[%s224 + $0x1c] sm:$0xf] %v578
        %591 = vst [vmem:[%s224 + $0x20] sm:$0xf] %v579
        %592 = vst [vmem:[%s224 + $0x24] sm:$0xf] %v580
        %593 = vst [vmem:[%s224 + $0x28] sm:$0xf] %v581
        %594 = vst [vmem:[%s224 + $0x2c] sm:$0xf] %v582
      $region36: #{_lambda_.2} parent=27 // pred_fallthru
        _
      %s595 = smul.u32 12, %s18
      %p596 = scmp.lt.s32.totalorder %s595, 23
      %s597 = scalar_select %p596, %s595, 23
      %p598 = scmp.lt.s32.totalorder %s19, 0
      %s599 = scalar_select %p598, %s19, 0
      %s600 = sadd.s32 %s599, %s597
      %s601 = smul.addr %s600, 4
      %s602 = scalar_lea.vmem %s2, %s601
      // Predicated region
      $region37: #{_lambda_.2} parent=27 // pred_check
        %p603 = pneg %p108
      $region38: #{_lambda_.2} parent=27 // pred_check_branch
        %605 = sbr.rel (%p603) target = $region40
      $region39: #{_lambda_.2} parent=27 // pred_region
        %s606 = smul.u32 12, %s18
      $region40: #{_lambda_.2} parent=27 // pred_fallthru
        _
    $region28: #{_lambda_.2} parent=5 // pred_fallthru
      _
    %p607 = scmp.le.s32.totalorder 2, %s8
    // Predicated region
    $region41: #{_lambda_.2} parent=5 // pred_check
      %p608 = pneg %p607
    $region42: #{_lambda_.2} parent=5 // pred_check_branch
      %610 = sbr.rel (%p608) target = $region44
    $region43: #{_lambda_.2} parent=5 // pred_region
      %s611 = ssub.s32 %s8, 2
      // Predicated region
      $region45: #{_lambda_.2} parent=43 // pred_check
        %p612 = pneg %p114
      $region46: #{_lambda_.2} parent=43 // pred_check_branch
        %614 = sbr.rel (%p612) target = $region48
      $region47: #{_lambda_.2} parent=43 // pred_region
        %s615 = smul.u32 12, %s21
        %p616 = scmp.lt.s32.totalorder %s615, 23
        %s617 = scalar_select %p616, %s615, 23
        %p618 = scmp.lt.s32.totalorder %s22, 0
        %s619 = scalar_select %p618, %s22, 0
        %s620 = sadd.s32 %s619, %s617
        %s621 = smul.addr %s620, 4
        %s622 = scalar_lea.vmem %s2, %s621
      $region48: #{_lambda_.2} parent=43 // pred_fallthru
        _
    $region44: #{_lambda_.2} parent=5 // pred_fallthru
      _
  $region6: #{_lambda_.2} parent=0 // loop_footer
    %s12 = sadd.s32 1, %s8
  $region7: #{_lambda_.2} parent=0 // loop_footer_branch
    %7 = sbr.rel target = $region3
  $region8: #{_lambda_.2} parent=0 // loop_exit
    _

// kernel: _lambda_.3
$region0: #{_lambda_.3}
  #allocation0 [shape = 'u32[]', space=smem, size = 0x4, offset = 0x4, fixed_abs, tag = 'smem constant byte address 0x4 - core index']
  #allocation1 [shape = 'u32[72,128]{1,0:T(1,128)}', space=vmem, size = 0x9000, scoped, tag = 'internal scratch']
  #allocation2 [shape = 'f32[96,128]{1,0:T(8,128)}', space=vmem, size = 0xc000, scoped, tag = 'scratch operand']
  %s0 = inlined_call_operand.vmem [shape: bf16[192,256], index: 0, kind: input, shape index: {}]
  %s1 = inlined_call_operand.vmem [shape: bf16[256,128], index: 1, kind: input, shape index: {}]
  %s2 = inlined_call_operand.vmem [shape: f32[1,128], index: 2, kind: input, shape index: {}]
  %s3 = inlined_call_operand.hbm [shape: f32[192,128], index: 3, kind: output, shape index: {}]
  %s4 = sld [smem:[#allocation0]]
  $region53: #{_lambda_.3} parent=0
    _
  %s6 = ssub.s32 1, %s4
  %s7 = scalar_select 0, %s6, %s4
  $region1: #{_lambda_.3} parent=0
    #allocation3 [shape = 'u8[98304]{0}', space=vmem, size = 0x18000, scoped, tag = 'output window, operand 0']
    #allocation4 [shape = 's32[2]{0}', space=sflag, size = 0x8, scoped, tag = 'scoped memory for _lambda_.3']
    %8 = vsyncpa [#allocation4], 0
    %s9 = scalar_lea.sflag [#allocation4], 1
    %10 = vsyncpa %s9, 0
    loop: start=0, step=1, limit=4
    $region2: #{_lambda_.3} parent=1 // loop_pre_header
      _
    $region3: #{_lambda_.3} parent=1 // loop_header
      %s12 = sphi 0, %s16
      %p13 = scmp.ge.s32.totalorder %s12, 4
      %s19 = sphi 0, %s38
      %s20 = sphi 0, %s34
      %s21 = sphi 0, %s30
      %s22 = sphi 0, %s19
      %s23 = sphi 0, %s20
      %s24 = sphi 0, %s21
      %s25 = sphi 0, %s22
      %s26 = sphi 0, %s23
      %s27 = sphi 0, %s24
      %s43 = sphi 0, %s45
      %s46 = sphi 0, %s43
      %s47 = sphi 0, %s46
      %s63 = sphi 0, %s47
      %s71 = sphi 0, %s73
      %s74 = sphi 0, %s71
      %s75 = sphi 0, %s74
      %s91 = sphi 0, %s75
      %s97 = sphi 0, %s99
      %s100 = sphi 0, %s97
      %s101 = sphi 0, %s100
      %s117 = sphi 0, %s101
      %s125 = sphi 0, %s127
      %s128 = sphi 0, %s125
      %s129 = sphi 0, %s128
      %s145 = sphi 0, %s129
    $region4: #{_lambda_.3} parent=1 // loop_header_branch
      %15 = sbr.rel (%p13) target = $region8
    $region5: #{_lambda_.3} parent=1 // loop_body
      %s17 = ssub.s32 %s12, 1
      %s18 = ssub.s32 %s12, 2
      %s28 = sadd.s32 1, %s21
      %p29 = scmp.ge.s32.totalorder %s28, 1
      %s30 = scalar_select %p29, 0, %s28
      %s31 = sadd.s32 1, %s20
      %s32 = scalar_select %p29, %s31, %s20
      %p33 = scmp.ge.s32.totalorder %s32, 1
      %s34 = scalar_select %p33, 0, %s32
      %s35 = sadd.s32 1, %s19
      %s36 = scalar_select %p33, %s35, %s19
      %p37 = scmp.ge.s32.totalorder %s36, 2
      %s38 = scalar_select %p37, 0, %s36
      %s39 = ssub.s32 %s19, %s38
      %s40 = ssub.s32 %s21, %s30
      %s41 = sor.u32 %s39, %s40
      %p42 = scmp.eq.s32.totalorder %s41, 0
      %s44 = sadd.s32 %s43, 1
      %s45 = scalar_select %p42, %s43, %s44
      %p48 = pneg %p42
      %p49 = scmp.eq.s32.totalorder %s12, 1
      %p50 = por %p48, %p49
      %p51 = scmp.ne.s32.totalorder %s43, %s46
      %p52 = scmp.eq.s32.totalorder %s12, 0
      %p53 = por %p51, %p52
      %p54 = scmp.ne.s32.totalorder %s43, %s46
      %p55 = scmp.eq.s32.totalorder %s17, 1
      %p56 = por %p54, %p55
      %p57 = scmp.ne.s32.totalorder %s46, %s47
      %p58 = scmp.eq.s32.totalorder %s17, 0
      %p59 = por %p57, %p58
      %p60 = scmp.ne.s32.totalorder %s46, %s47
      %p61 = scmp.eq.s32.totalorder %s18, 1
      %p62 = por %p60, %p61
      %p64 = scmp.ne.s32.totalorder %s47, %s63
      %p65 = scmp.eq.s32.totalorder %s18, 0
      %p66 = por %p64, %p65
      %s67 = ssub.s32 %s21, %s30
      %s68 = ssub.s32 %s20, %s34
      %s69 = sor.u32 %s67, %s68
      %p70 = scmp.eq.s32.totalorder %s69, 0
      %s72 = sadd.s32 %s71, 1
      %s73 = scalar_select %p70, %s71, %s72
      %p76 = pneg %p70
      %p77 = scmp.eq.s32.totalorder %s12, 1
      %p78 = por %p76, %p77
      %p79 = scmp.ne.s32.totalorder %s71, %s74
      %p80 = scmp.eq.s32.totalorder %s12, 0
      %p81 = por %p79, %p80
      %p82 = scmp.ne.s32.totalorder %s71, %s74
      %p83 = scmp.eq.s32.totalorder %s17, 1
      %p84 = por %p82, %p83
      %p85 = scmp.ne.s32.totalorder %s74, %s75
      %p86 = scmp.eq.s32.totalorder %s17, 0
      %p87 = por %p85, %p86
      %p88 = scmp.ne.s32.totalorder %s74, %s75
      %p89 = scmp.eq.s32.totalorder %s18, 1
      %p90 = por %p88, %p89
      %p92 = scmp.ne.s32.totalorder %s75, %s91
      %p93 = scmp.eq.s32.totalorder %s18, 0
      %p94 = por %p92, %p93
      %s95 = ssub.s32 %s20, %s34
      %p96 = scmp.eq.s32.totalorder %s95, 0
      %s98 = sadd.s32 %s97, 1
      %s99 = scalar_select %p96, %s97, %s98
      %p102 = pneg %p96
      %p103 = scmp.eq.s32.totalorder %s12, 1
      %p104 = por %p102, %p103
      %p105 = scmp.ne.s32.totalorder %s97, %s100
      %p106 = scmp.eq.s32.totalorder %s12, 0
      %p107 = por %p105, %p106
      %p108 = scmp.ne.s32.totalorder %s97, %s100
      %p109 = scmp.eq.s32.totalorder %s17, 1
      %p110 = por %p108, %p109
      %p111 = scmp.ne.s32.totalorder %s100, %s101
      %p112 = scmp.eq.s32.totalorder %s17, 0
      %p113 = por %p111, %p112
      %p114 = scmp.ne.s32.totalorder %s100, %s101
      %p115 = scmp.eq.s32.totalorder %s18, 1
      %p116 = por %p114, %p115
      %p118 = scmp.ne.s32.totalorder %s101, %s117
      %p119 = scmp.eq.s32.totalorder %s18, 0
      %p120 = por %p118, %p119
      %s121 = ssub.s32 %s19, %s38
      %s122 = ssub.s32 %s20, %s34
      %s123 = sor.u32 %s121, %s122
      %p124 = scmp.eq.s32.totalorder %s123, 0
      %s126 = sadd.s32 %s125, 1
      %s127 = scalar_select %p124, %s125, %s126
      %p130 = pneg %p124
      %p131 = scmp.eq.s32.totalorder %s12, 1
      %p132 = por %p130, %p131
      %p133 = scmp.ne.s32.totalorder %s125, %s128
      %p134 = scmp.eq.s32.totalorder %s12, 0
      %p135 = por %p133, %p134
      %p136 = scmp.ne.s32.totalorder %s125, %s128
      %p137 = scmp.eq.s32.totalorder %s17, 1
      %p138 = por %p136, %p137
      %p139 = scmp.ne.s32.totalorder %s128, %s129
      %p140 = scmp.eq.s32.totalorder %s17, 0
      %p141 = por %p139, %p140
      %p142 = scmp.ne.s32.totalorder %s128, %s129
      %p143 = scmp.eq.s32.totalorder %s18, 1
      %p144 = por %p142, %p143
      %p146 = scmp.ne.s32.totalorder %s129, %s145
      %p147 = scmp.eq.s32.totalorder %s18, 0
      %p148 = por %p146, %p147
      %p149 = scmp.le.s32.totalorder 1, %s12
      %p150 = scmp.lt.s32.totalorder %s12, 3
      %p151 = pnand %p149, %p150
      %p152 = pneg %p151
      // Predicated region
      $region9: #{_lambda_.3} parent=5 // pred_check
        _
      $region10: #{_lambda_.3} parent=5 // pred_check_branch
        %154 = sbr.rel (%p151) target = $region12
      $region11: #{_lambda_.3} parent=5 // pred_region
        %s155 = ssub.s32 %s12, 1
        // Predicated region
        $region13: #{_lambda_.3} parent=11 // pred_check
          %p156 = pneg %p87
        $region14: #{_lambda_.3} parent=11 // pred_check_branch
          %158 = sbr.rel (%p156) target = $region16
        $region15: #{_lambda_.3} parent=11 // pred_region
          %s159 = smul.u32 32, %s24
          %p160 = scmp.lt.s32.totalorder %s159, 31
          %s161 = scalar_select %p160, %s159, 31
          %p162 = scmp.lt.s32.totalorder %s23, 0
          %s163 = scalar_select %p162, %s23, 0
          %s164 = sadd.s32 %s163, %s161
          %s165 = smul.addr %s164, 4
          %s166 = scalar_lea.vmem %s1, %s165
          %s167 = smul.u32 32, %s24
        $region16: #{_lambda_.3} parent=11 // pred_fallthru
          _
        // Predicated region
        $region17: #{_lambda_.3} parent=11 // pred_check
          %p168 = pneg %p113
        $region18: #{_lambda_.3} parent=11 // pred_check_branch
          %170 = sbr.rel (%p168) target = $region20
        $region19: #{_lambda_.3} parent=11 // pred_region
          %p171 = scmp.lt.s32.totalorder %s23, 0
          %s172 = scalar_select %p171, %s23, 0
          %s173 = scalar_lea.vmem %s2, %s172
        $region20: #{_lambda_.3} parent=11 // pred_fallthru
          _
      $region12: #{_lambda_.3} parent=5 // pred_fallthru
        _
      %p174 = scmp.lt.s32.totalorder %s12, 2
      // Predicated region
      $region21: #{_lambda_.3} parent=5 // pred_check
        %p175 = pneg %p174
      $region22: #{_lambda_.3} parent=5 // pred_check_branch
        %177 = sbr.rel (%p175) target = $region24
      $region23: #{_lambda_.3} parent=5 // pred_region
        // Predicated region
        $region25: #{_lambda_.3} parent=23 // pred_check
          %p178 = pneg %p53
        $region26: #{_lambda_.3} parent=23 // pred_check_branch
          %180 = sbr.rel (%p178) target = $region28
        $region27: #{_lambda_.3} parent=23 // pred_region
          %s181 = smul.u32 12, %s19
          %s182 = smul.u32 2, %s21
          %p183 = scmp.lt.s32.totalorder %s181, 23
          %s184 = scalar_select %p183, %s181, 23
          %p185 = scmp.lt.s32.totalorder %s182, 1
          %s186 = scalar_select %p185, %s182, 1
          %s187 = smul.addr %s184, 2
          %s188 = sadd.s32 %s186, %s187
          %s189 = smul.addr %s188, 4
          %s190 = scalar_lea.vmem %s0, %s189
          %s191 = smul.u32 12, %s19
          %s192 = smul.u32 2, %s21
        $region28: #{_lambda_.3} parent=23 // pred_fallthru
          _
      $region24: #{_lambda_.3} parent=5 // pred_fallthru
        _
      %p193 = scmp.le.s32.totalorder 1, %s12
      %p194 = scmp.lt.s32.totalorder %s12, 3
      %p195 = pnand %p193, %p194
      %p196 = pneg %p195
      // Predicated region
      $region29: #{_lambda_.3} parent=5 // pred_check
        _
      $region30: #{_lambda_.3} parent=5 // pred_check_branch
        %198 = sbr.rel (%p195) target = $region32
      $region31: #{_lambda_.3} parent=5 // pred_region
        %s199 = ssub.s32 %s12, 1
        %s200 = smul.u32 12, %s22
        %s201 = smul.u32 2, %s24
        %p202 = scmp.lt.s32.totalorder %s200, 23
        %s203 = scalar_select %p202, %s200, 23
        %p204 = scmp.lt.s32.totalorder %s201, 1
        %s205 = scalar_select %p204, %s201, 1
        %s206 = smul.addr %s203, 2
        %s207 = sadd.s32 %s205, %s206
        %s208 = smul.addr %s207, 4
        %s209 = scalar_lea.vmem %s0, %s208
        %p210 = pneg %p59
        %p211 = pneg %p56
        %s212 = smul.u32 32, %s24
        %p213 = scmp.lt.s32.totalorder %s212, 31
        %s214 = scalar_select %p213, %s212, 31
        %p215 = scmp.lt.s32.totalorder %s23, 0
        %s216 = scalar_select %p215, %s23, 0
        %s217 = sadd.s32 %s216, %s214
        %s218 = smul.addr %s217, 4
        %s219 = scalar_lea.vmem %s1, %s218
        %p220 = pneg %p87
        %p221 = pneg %p84
        %p222 = scmp.lt.s32.totalorder %s23, 0
        %s223 = scalar_select %p222, %s23, 0
        %s224 = scalar_lea.vmem %s2, %s223
        %p225 = pneg %p113
        %p226 = pneg %p110
        %p227 = pneg %p141
        %p228 = pneg %p138
        %s229 = sand.u32 %s128, 1
        %s230 = scalar_lea.sflag [#allocation4], %s229
        %s231 = sand.u32 %s128, 1
        %s232 = smul.addr %s231, 96
        %s233 = scalar_lea.vmem [#allocation3], %s232
        %s234 = smul.u32 12, %s22
        %s235 = smul.u32 2, %s24
        %p236 = scmp.lt.s32.totalorder %s234, 23
        %s237 = scalar_select %p236, %s234, 23
        %p238 = scmp.lt.s32.totalorder %s235, 1
        %s239 = scalar_select %p238, %s235, 1
        %s240 = smul.addr %s237, 2
        %s241 = sadd.s32 %s239, %s240
        %s242 = smul.addr %s241, 4
        %s243 = scalar_lea.vmem %s0, %s242
        %s244 = smul.u32 12, %s22
        %s245 = smul.u32 2, %s24
        %s246 = smul.u32 32, %s24
        %p247 = scmp.lt.s32.totalorder %s246, 31
        %s248 = scalar_select %p247, %s246, 31
        %p249 = scmp.lt.s32.totalorder %s23, 0
        %s250 = scalar_select %p249, %s23, 0
        %s251 = sadd.s32 %s250, %s248
        %s252 = smul.addr %s251, 4
        %s253 = scalar_lea.vmem %s1, %s252
        %s254 = smul.u32 32, %s24
        %p255 = scmp.lt.s32.totalorder %s23, 0
        %s256 = scalar_select %p255, %s23, 0
        %s257 = scalar_lea.vmem %s2, %s256
        %s258 = smul.u32 12, %s22
        %p259 = scmp.eq.s32.totalorder %s24, 0
        // Predicated region
        $region33: #{_lambda_.3} parent=31 // pred_check
          %p260 = pneg %p259
        $region34: #{_lambda_.3} parent=31 // pred_check_branch
          %262 = sbr.rel (%p260) target = $region36
        $region35: #{_lambda_.3} parent=31 // pred_region
          %263 = vst [vmem:[#allocation2] sm:$0xff] 0.0
          %264 = vst [vmem:[#allocation2 + $0x8] sm:$0xff] 0.0
          %265 = vst [vmem:[#allocation2 + $0x10] sm:$0xff] 0.0
          %266 = vst [vmem:[#allocation2 + $0x18] sm:$0xff] 0.0
          %267 = vst [vmem:[#allocation2 + $0x20] sm:$0xff] 0.0
          %268 = vst [vmem:[#allocation2 + $0x28] sm:$0xff] 0.0
          %269 = vst [vmem:[#allocation2 + $0x30] sm:$0xff] 0.0
          %270 = vst [vmem:[#allocation2 + $0x38] sm:$0xff] 0.0
          %271 = vst [vmem:[#allocation2 + $0x40] sm:$0xff] 0.0
          %272 = vst [vmem:[#allocation2 + $0x48] sm:$0xff] 0.0
          %273 = vst [vmem:[#allocation2 + $0x50] sm:$0xff] 0.0
          %274 = vst [vmem:[#allocation2 + $0x58] sm:$0xff] 0.0
        $region36: #{_lambda_.3} parent=31 // pred_fallthru
          _
        %v275 = vld [vmem:[%s253] sm:$0xf]
        %v276 = vld [vmem:[%s253 + $0x4] sm:$0xf]
        %v277 = vld [vmem:[%s253 + $0x8] sm:$0xf]
        %v278 = vld [vmem:[%s253 + $0xc] sm:$0xf]
        %v279 = vld [vmem:[%s253 + $0x10] sm:$0xf]
        %v280 = vld [vmem:[%s253 + $0x14] sm:$0xf]
        %v281 = vld [vmem:[%s253 + $0x18] sm:$0xf]
        %v282 = vld [vmem:[%s253 + $0x1c] sm:$0xf]
        %v283 = vld [vmem:[%s253 + $0x20] sm:$0xf]
        %v284 = vld [vmem:[%s253 + $0x24] sm:$0xf]
        %v285 = vld [vmem:[%s253 + $0x28] sm:$0xf]
        %v286 = vld [vmem:[%s253 + $0x2c] sm:$0xf]
        %v287 = vld [vmem:[%s253 + $0x30] sm:$0xf]
        %v288 = vld [vmem:[%s253 + $0x34] sm:$0xf]
        %v289 = vld [vmem:[%s253 + $0x38] sm:$0xf]
        %v290 = vld [vmem:[%s253 + $0x3c] sm:$0xf]
        %v291 = vld [vmem:[%s253 + $0x40] sm:$0xf]
        %v292 = vld [vmem:[%s253 + $0x44] sm:$0xf]
        %v293 = vld [vmem:[%s253 + $0x48] sm:$0xf]
        %v294 = vld [vmem:[%s253 + $0x4c] sm:$0xf]
        %v295 = vld [vmem:[%s253 + $0x50] sm:$0xf]
        %v296 = vld [vmem:[%s253 + $0x54] sm:$0xf]
        %v297 = vld [vmem:[%s253 + $0x58] sm:$0xf]
        %v298 = vld [vmem:[%s253 + $0x5c] sm:$0xf]
        %v299 = vld [vmem:[%s253 + $0x60] sm:$0xf]
        %v300 = vld [vmem:[%s253 + $0x64] sm:$0xf]
        %v301 = vld [vmem:[%s253 + $0x68] sm:$0xf]
        %v302 = vld [vmem:[%s253 + $0x6c] sm:$0xf]
        %v303 = vld [vmem:[%s253 + $0x70] sm:$0xf]
        %v304 = vld [vmem:[%s253 + $0x74] sm:$0xf]
        %v305 = vld [vmem:[%s253 + $0x78] sm:$0xf]
        %v306 = vld [vmem:[%s253 + $0x7c] sm:$0xf]
        %v307 = vld [vmem:[#allocation2] sm:$0xff]
        %v308 = vld [vmem:[#allocation2 + $0x8] sm:$0xff]
        %v309 = vld [vmem:[#allocation2 + $0x10] sm:$0xff]
        %v310 = vld [vmem:[#allocation2 + $0x18] sm:$0xff]
        %v311 = vld [vmem:[#allocation2 + $0x20] sm:$0xff]
        %v312 = vld [vmem:[#allocation2 + $0x28] sm:$0xff]
        %v313 = vld [vmem:[#allocation2 + $0x30] sm:$0xff]
        %v314 = vld [vmem:[#allocation2 + $0x38] sm:$0xff]
        %v315 = vld [vmem:[#allocation2 + $0x40] sm:$0xff]
        %v316 = vld [vmem:[#allocation2 + $0x48] sm:$0xff]
        %v317 = vld [vmem:[#allocation2 + $0x50] sm:$0xff]
        %v318 = vld [vmem:[#allocation2 + $0x58] sm:$0xff]
        %v319 = vld [vmem:[%s243] sm:$0xff]
        %v320 = vld [vmem:[%s243 + $0x8] sm:$0xff]
        %v321 = vld [vmem:[%s243 + $0x10] sm:$0xff]
        %v322 = vld [vmem:[%s243 + $0x18] sm:$0xff]
        %v323 = vld [vmem:[%s243 + $0x20] sm:$0xff]
        %v324 = vld [vmem:[%s243 + $0x28] sm:$0xff]
        %v325 = vld [vmem:[%s243 + $0x30] sm:$0xff]
        %v326 = vld [vmem:[%s243 + $0x38] sm:$0xff]
        %v327 = vld [vmem:[%s243 + $0x40] sm:$0xff]
        %v328 = vld [vmem:[%s243 + $0x48] sm:$0xff]
        %v329 = vld [vmem:[%s243 + $0x50] sm:$0xff]
        %v330 = vld [vmem:[%s243 + $0x58] sm:$0xff]
        %v343 = vunpack.c.l.b16 %v319
        %v344 = vunpack.c.h.b16 %v319
        %v345 = vunpack.c.l.b16 %v320
        %v346 = vunpack.c.h.b16 %v320
        %v347 = vunpack.c.l.b16 %v321
        %v348 = vunpack.c.h.b16 %v321
        %v349 = vunpack.c.l.b16 %v322
        %v350 = vunpack.c.h.b16 %v322
        %v351 = vunpack.c.l.b16 %v323
        %v352 = vunpack.c.h.b16 %v323
        %v353 = vunpack.c.l.b16 %v324
        %v354 = vunpack.c.h.b16 %v324
        %v355 = vunpack.c.l.b16 %v325
        %v356 = vunpack.c.h.b16 %v325
        %v357 = vunpack.c.l.b16 %v326
        %v358 = vunpack.c.h.b16 %v326
        %v359 = vunpack.c.l.b16 %v327
        %v360 = vunpack.c.h.b16 %v327
        %v361 = vunpack.c.l.b16 %v328
        %v362 = vunpack.c.h.b16 %v328
        %v363 = vunpack.c.l.b16 %v329
        %v364 = vunpack.c.h.b16 %v329
        %v365 = vunpack.c.l.b16 %v330
        %v366 = vunpack.c.h.b16 %v330
        %v367 = vpack.c.b16 %v345, %v343
        %v368 = vpack.c.b16 %v346, %v344
        %v369 = vpack.c.b16 %v349, %v347
        %v370 = vpack.c.b16 %v350, %v348
        %v371 = vpack.c.b16 %v353, %v351
        %v372 = vpack.c.b16 %v354, %v352
        %v373 = vpack.c.b16 %v357, %v355
        %v374 = vpack.c.b16 %v358, %v356
        %v375 = vpack.c.b16 %v361, %v359
        %v376 = vpack.c.b16 %v362, %v360
        %v377 = vpack.c.b16 %v365, %v363
        %v378 = vpack.c.b16 %v366, %v364
        %v423 = vunpack.c.l.b16 %v275
        %v424 = vunpack.c.l.b16 %v276
        %v425 = vunpack.c.l.b16 %v277
        %v426 = vunpack.c.l.b16 %v278
        %v427 = vunpack.c.l.b16 %v279
        %v428 = vunpack.c.l.b16 %v280
        %v429 = vunpack.c.l.b16 %v281
        %v430 = vunpack.c.l.b16 %v282
        %v431 = vunpack.c.l.b16 %v283
        %v432 = vunpack.c.l.b16 %v284
        %v433 = vunpack.c.l.b16 %v285
        %v434 = vunpack.c.l.b16 %v286
        %v435 = vunpack.c.l.b16 %v287
        %v436 = vunpack.c.l.b16 %v288
        %v437 = vunpack.c.l.b16 %v289
        %v438 = vunpack.c.l.b16 %v290
        %v439 = vunpack.c.l.b16 %v291
        %v440 = vunpack.c.l.b16 %v292
        %v441 = vunpack.c.l.b16 %v293
        %v442 = vunpack.c.l.b16 %v294
        %v443 = vunpack.c.l.b16 %v295
        %v444 = vunpack.c.l.b16 %v296
        %v445 = vunpack.c.l.b16 %v297
        %v446 = vunpack.c.l.b16 %v298
        %v447 = vunpack.c.l.b16 %v299
        %v448 = vunpack.c.l.b16 %v300
        %v449 = vunpack.c.l.b16 %v301
        %v450 = vunpack.c.l.b16 %v302
        %v451 = vunpack.c.l.b16 %v303
        %v452 = vunpack.c.l.b16 %v304
        %v453 = vunpack.c.l.b16 %v305
        %v454 = vunpack.c.l.b16 %v306
        %v455 = vpack.c.b16 %v424, %v423
        %v456 = vpack.c.b16 %v426, %v425
        %v457 = vpack.c.b16 %v428, %v427
        %v458 = vpack.c.b16 %v430, %v429
        %v459 = vpack.c.b16 %v432, %v431
        %v460 = vpack.c.b16 %v434, %v433
        %v461 = vpack.c.b16 %v436, %v435
        %v462 = vpack.c.b16 %v438, %v437
        %v463 = vpack.c.b16 %v440, %v439
        %v464 = vpack.c.b16 %v442, %v441
        %v465 = vpack.c.b16 %v444, %v443
        %v466 = vpack.c.b16 %v446, %v445
        %v467 = vpack.c.b16 %v448, %v447
        %v468 = vpack.c.b16 %v450, %v449
        %v469 = vpack.c.b16 %v452, %v451
        %v470 = vpack.c.b16 %v454, %v453
        %487 = vmatpush.bf16.msra.mxu0 %v462
        %488 = vmatpush.bf16.msra.mxu0 %v461
        %489 = vmatpush.bf16.msra.mxu0 %v460
        %490 = vmatpush.bf16.msra.mxu0 %v459
        %491 = vmatpush.bf16.msra.mxu0 %v458
        %492 = vmatpush.bf16.msra.mxu0 %v457
        %493 = vmatpush.bf16.msra.mxu0 %v456
        %494 = vmatpush.bf16.msra.mxu0 %v455
        %495 = vmatmul.bf16.gmra.mxu0 %v367
        %v496 = vpop.f32.mrf.mxu0
        %v497 = vadd.f32 0.0, %v496
        %v498 = vpop.f32.mrf.mxu0
        %v499 = vadd.f32 0.0, %v498
        %500 = vmatmul.bf16.gmra.mxu0 %v369
        %v501 = vpop.f32.mrf.mxu0
        %v502 = vadd.f32 0.0, %v501
        %v503 = vpop.f32.mrf.mxu0
        %v504 = vadd.f32 0.0, %v503
        %505 = vmatmul.bf16.gmra.mxu0 %v371
        %v506 = vpop.f32.mrf.mxu0
        %v507 = vadd.f32 0.0, %v506
        %v508 = vpop.f32.mrf.mxu0
        %v509 = vadd.f32 0.0, %v508
        %510 = vmatmul.bf16.gmra.mxu0 %v373
        %v511 = vpop.f32.mrf.mxu0
        %v512 = vadd.f32 0.0, %v511
        %v513 = vpop.f32.mrf.mxu0
        %v514 = vadd.f32 0.0, %v513
        %515 = vmatmul.bf16.gmra.mxu0 %v375
        %v516 = vpop.f32.mrf.mxu0
        %v517 = vadd.f32 0.0, %v516
        %v518 = vpop.f32.mrf.mxu0
        %v519 = vadd.f32 0.0, %v518
        %520 = vmatmul.bf16.gmra.mxu0 %v377
        %v521 = vpop.f32.mrf.mxu0
        %v522 = vadd.f32 0.0, %v521
        %v523 = vpop.f32.mrf.mxu0
        %v524 = vadd.f32 0.0, %v523
        %525 = vdwg.mxu0
        %526 = vmatpush.bf16.msra.mxu0 %v470
        %527 = vmatpush.bf16.msra.mxu0 %v469
        %528 = vmatpush.bf16.msra.mxu0 %v468
        %529 = vmatpush.bf16.msra.mxu0 %v467
        %530 = vmatpush.bf16.msra.mxu0 %v466
        %531 = vmatpush.bf16.msra.mxu0 %v465
        %532 = vmatpush.bf16.msra.mxu0 %v464
        %533 = vmatpush.bf16.msra.mxu0 %v463
        %534 = vmatmul.bf16.gmra.mxu0 %v368
        %v535 = vpop.f32.mrf.mxu0
        %v536 = vadd.f32 %v497, %v535
        %v537 = vpop.f32.mrf.mxu0
        %v538 = vadd.f32 %v499, %v537
        %539 = vmatmul.bf16.gmra.mxu0 %v370
        %v540 = vpop.f32.mrf.mxu0
        %v541 = vadd.f32 %v502, %v540
        %v542 = vpop.f32.mrf.mxu0
        %v543 = vadd.f32 %v504, %v542
        %544 = vmatmul.bf16.gmra.mxu0 %v372
        %v545 = vpop.f32.mrf.mxu0
        %v546 = vadd.f32 %v507, %v545
        %v547 = vpop.f32.mrf.mxu0
        %v548 = vadd.f32 %v509, %v547
        %549 = vmatmul.bf16.gmra.mxu0 %v374
        %v550 = vpop.f32.mrf.mxu0
        %v551 = vadd.f32 %v512, %v550
        %v552 = vpop.f32.mrf.mxu0
        %v553 = vadd.f32 %v514, %v552
        %554 = vmatmul.bf16.gmra.mxu0 %v376
        %v555 = vpop.f32.mrf.mxu0
        %v556 = vadd.f32 %v517, %v555
        %v557 = vpop.f32.mrf.mxu0
        %v558 = vadd.f32 %v519, %v557
        %559 = vmatmul.bf16.gmra.mxu0 %v378
        %v560 = vpop.f32.mrf.mxu0
        %v561 = vadd.f32 %v522, %v560
        %v562 = vpop.f32.mrf.mxu0
        %v563 = vadd.f32 %v524, %v562
        %564 = vdwg.mxu0
        %v565 = vadd.f32 %v307, %v536
        %v566 = vadd.f32 %v308, %v538
        %v567 = vadd.f32 %v309, %v541
        %v568 = vadd.f32 %v310, %v543
        %v569 = vadd.f32 %v311, %v546
        %v570 = vadd.f32 %v312, %v548
        %v571 = vadd.f32 %v313, %v551
        %v572 = vadd.f32 %v314, %v553
        %v573 = vadd.f32 %v315, %v556
        %v574 = vadd.f32 %v316, %v558
        %v575 = vadd.f32 %v317, %v561
        %v576 = vadd.f32 %v318, %v563
        %577 = vst [vmem:[#allocation2] sm:$0xff] %v565
        %578 = vst [vmem:[#allocation2 + $0x8] sm:$0xff] %v566
        %579 = vst [vmem:[#allocation2 + $0x10] sm:$0xff] %v567
        %580 = vst [vmem:[#allocation2 + $0x18] sm:$0xff] %v568
        %581 = vst [vmem:[#allocation2 + $0x20] sm:$0xff] %v569
        %582 = vst [vmem:[#allocation2 + $0x28] sm:$0xff] %v570
        %583 = vst [vmem:[#allocation2 + $0x30] sm:$0xff] %v571
        %584 = vst [vmem:[#allocation2 + $0x38] sm:$0xff] %v572
        %585 = vst [vmem:[#allocation2 + $0x40] sm:$0xff] %v573
        %586 = vst [vmem:[#allocation2 + $0x48] sm:$0xff] %v574
        %587 = vst [vmem:[#allocation2 + $0x50] sm:$0xff] %v575
        %588 = vst [vmem:[#allocation2 + $0x58] sm:$0xff] %v576
        // Predicated region
        $region37: #{_lambda_.3} parent=31 // pred_check
          %p589 = pneg %p259
        $region38: #{_lambda_.3} parent=31 // pred_check_branch
          %591 = sbr.rel (%p589) target = $region40
        $region39: #{_lambda_.3} parent=31 // pred_region
          %v592 = vld [vmem:[#allocation2] sm:$0xff]
          %v593 = vld [vmem:[#allocation2 + $0x8] sm:$0xff]
          %v594 = vld [vmem:[#allocation2 + $0x10] sm:$0xff]
          %v595 = vld [vmem:[#allocation2 + $0x18] sm:$0xff]
          %v596 = vld [vmem:[#allocation2 + $0x20] sm:$0xff]
          %v597 = vld [vmem:[#allocation2 + $0x28] sm:$0xff]
          %v598 = vld [vmem:[#allocation2 + $0x30] sm:$0xff]
          %v599 = vld [vmem:[#allocation2 + $0x38] sm:$0xff]
          %v600 = vld [vmem:[#allocation2 + $0x40] sm:$0xff]
          %v601 = vld [vmem:[#allocation2 + $0x48] sm:$0xff]
          %v602 = vld [vmem:[#allocation2 + $0x50] sm:$0xff]
          %v603 = vld [vmem:[#allocation2 + $0x58] sm:$0xff]
          %v604 = vld [vmem:[%s257] sm:$0x1]
          %v606 = vperm.slane %v604, 0
          %v608 = vadd.f32 %v592, %v606
          %v609 = vadd.f32 %v593, %v606
          %v610 = vadd.f32 %v594, %v606
          %v611 = vadd.f32 %v595, %v606
          %v612 = vadd.f32 %v596, %v606
          %v613 = vadd.f32 %v597, %v606
          %v614 = vadd.f32 %v598, %v606
          %v615 = vadd.f32 %v599, %v606
          %v616 = vadd.f32 %v600, %v606
          %v617 = vadd.f32 %v601, %v606
          %v618 = vadd.f32 %v602, %v606
          %v619 = vadd.f32 %v603, %v606
          %620 = vst [vmem:[%s233] sm:$0xff] %v608
          %621 = vst [vmem:[%s233 + $0x8] sm:$0xff] %v609
          %622 = vst [vmem:[%s233 + $0x10] sm:$0xff] %v610
          %623 = vst [vmem:[%s233 + $0x18] sm:$0xff] %v611
          %624 = vst [vmem:[%s233 + $0x20] sm:$0xff] %v612
          %625 = vst [vmem:[%s233 + $0x28] sm:$0xff] %v613
          %626 = vst [vmem:[%s233 + $0x30] sm:$0xff] %v614
          %627 = vst [vmem:[%s233 + $0x38] sm:$0xff] %v615
          %628 = vst [vmem:[%s233 + $0x40] sm:$0xff] %v616
          %629 = vst [vmem:[%s233 + $0x48] sm:$0xff] %v617
          %630 = vst [vmem:[%s233 + $0x50] sm:$0xff] %v618
          %631 = vst [vmem:[%s233 + $0x58] sm:$0xff] %v619
        $region40: #{_lambda_.3} parent=31 // pred_fallthru
          _
        %s632 = sand.u32 %s128, 1
        %s633 = scalar_lea.sflag [#allocation4], %s632
        %s634 = sand.u32 %s128, 1
        %s635 = smul.addr %s634, 96
        %s636 = scalar_lea.vmem [#allocation3], %s635
        // Predicated region
        $region41: #{_lambda_.3} parent=31 // pred_check
          %p637 = pneg %p138
        $region42: #{_lambda_.3} parent=31 // pred_check_branch
          %639 = sbr.rel (%p637) target = $region44
        $region43: #{_lambda_.3} parent=31 // pred_region
          %s640 = smul.u32 12, %s22
          %642 = vsyncadd %s633, 0
          %s643 = sadd.s32 %s23, %s640
          %s644 = smul.addr %s643, 8
          %s645 = scalar_lea.hbm %s3, %s644
          %s646 = sshll.u32 %s636, 4
          %s647 = int_to_ptr.vmem [resolvable:$true] %s646
          %s648 = sshll.u32 %s645, 4
          %s649 = int_to_ptr.hbm [resolvable:$true] %s648
          %654 = dma.vmem_to_hbm [thread:$0]  %s647, 1536, %s649, %s633, 128, 128, 8
        $region44: #{_lambda_.3} parent=31 // pred_fallthru
          _
      $region32: #{_lambda_.3} parent=5 // pred_fallthru
        _
      %p655 = scmp.le.s32.totalorder 2, %s12
      // Predicated region
      $region45: #{_lambda_.3} parent=5 // pred_check
        %p656 = pneg %p655
      $region46: #{_lambda_.3} parent=5 // pred_check_branch
        %658 = sbr.rel (%p656) target = $region48
      $region47: #{_lambda_.3} parent=5 // pred_region
        %s659 = ssub.s32 %s12, 2
        // Predicated region
        $region49: #{_lambda_.3} parent=47 // pred_check
          %p660 = pneg %p144
        $region50: #{_lambda_.3} parent=47 // pred_check_branch
          %662 = sbr.rel (%p660) target = $region52
        $region51: #{_lambda_.3} parent=47 // pred_region
          %s663 = sand.u32 %s129, 1
          %s664 = scalar_lea.sflag [#allocation4], %s663
          %s665 = sand.u32 %s129, 1
          %s666 = smul.addr %s665, 96
          %s667 = scalar_lea.vmem [#allocation3], %s666
          %669 = dma.done %s664, 1536
        $region52: #{_lambda_.3} parent=47 // pred_fallthru
          _
      $region48: #{_lambda_.3} parent=5 // pred_fallthru
        _
    $region6: #{_lambda_.3} parent=1 // loop_footer
      %s16 = sadd.s32 1, %s12
    $region7: #{_lambda_.3} parent=1 // loop_footer_branch
      %11 = sbr.rel target = $region3
    $region8: #{_lambda_.3} parent=1 // loop_exit
      _
    %670 = vsyncpa [#allocation4], 1
    %s671 = scalar_lea.sflag [#allocation4], 1
    %672 = vsyncpa %s671, 1

</llo_original>
